<compile_context>
chip_gen: v6e
topology: v6e:2x2x1
jax: 0.10.0
libtpu: 0.0.40
codegen_flags: <defaults>
</compile_context>

<pallas_src>
import jax
import jax.numpy as jnp
from jax.experimental import pallas as pl
from jax.experimental.pallas import tpu as pltpu


def low_kernel(a_idx_ref, bh_idx_ref, def_ref, iota_a_ref, iota_b_ref,
               cT_ref, a_tab_ref, bT_ref, out_ref):
    # a_idx_ref  : (1, tile)        int32  index into A / bias
    # bh_idx_ref : (1, tile)        int32  flattened index into B
    # def_ref    : (CD, tile)       bf16   def_pos with batch on lanes
    # iota_a_ref : (a_dims, tile)   int32  resident row-iota (hoisted)
    # iota_b_ref : (NB, tile)       int32  resident row-iota (hoisted)
    # cT_ref     : (K, CD)          bf16   resident C
    # a_tab_ref  : (K + 1, a_dims)  bf16   resident [A.T ; bias]
    # bT_ref     : (K, NB)          bf16   resident B.T
    # out_ref    : (1, tile)        f32    lane-dense output
    K = cT_ref.shape[0]

    # One-hot gathers (batch on lanes).  bf16 one-hots are exact; the gathers
    # are resolved on the MXU with f32 accumulation.
    onehot_a = (iota_a_ref[...] == a_idx_ref[...]
                ).astype(jnp.float32).astype(jnp.bfloat16)          # (a_dims, tile)
    onehot_b = (iota_b_ref[...] == bh_idx_ref[...]
                ).astype(jnp.float32).astype(jnp.bfloat16)          # (NB, tile)

    # einsum('bcd,cde->be') with batch on lanes: (K, CD) @ (CD, tile).
    e = jnp.dot(cT_ref[...], def_ref[...],
                preferred_element_type=jnp.float32)                 # (K, tile)
    # A gather with the bias folded in as a (K+1)-th table row.
    ab = jnp.dot(a_tab_ref[...], onehot_a,
                 preferred_element_type=jnp.float32)                # (K+1, tile)
    b_g = jnp.dot(bT_ref[...], onehot_b,
                  preferred_element_type=jnp.float32)               # (K, tile)

    a_g = ab[:K, :]                                                 # (K, tile)
    bias_g = ab[K:, :]                                              # (1, tile)

    prod = a_g * b_g * e                                            # VPU, dense lanes
    out_ref[...] = jnp.sum(prod, axis=0, keepdims=True) + bias_g    # sublane reduce


def low_forward(params, a, bh_pos, def_pos, *, tile_b=16384):
    A, B, C, bias = params["A"], params["B"], params["C"], params["b"]
    batch = a.shape[0]
    a_dims, K = A.shape
    b0, b1 = B.shape[0], B.shape[1]
    c0, c1 = C.shape[0], C.shape[1]
    CD, NB = c0 * c1, b0 * b1

    # ---- batch tiling: lane-dense tiles (multiple of 128), large by default,
    # and >= 2 grid steps whenever there is enough work (v7x has 2 TCs).
    tile_req = max(128, (int(tile_b) // 128) * 128)
    batch_128 = -(-batch // 128) * 128
    n_tiles = max(1, -(-batch_128 // tile_req))
    if n_tiles == 1 and batch_128 >= 2 * 128:
        n_tiles = 2
    tile = -(-batch_128 // (n_tiles * 128)) * 128
    batch_p = tile * n_tiles
    pad = batch_p - batch
    grid = (n_tiles,)

    # ---- glue: batch goes to the last (lane) axis; padded tail lanes read
    # index 0 and are sliced off below.
    a_idx = jnp.pad(a.astype(jnp.int32), (0, pad)).reshape(1, batch_p)
    bh_idx = jnp.pad(
        bh_pos[:, 0].astype(jnp.int32) * b1 + bh_pos[:, 1].astype(jnp.int32),
        (0, pad)).reshape(1, batch_p)
    # pad + bf16 downcast + transpose in one producer chain (single copy pass);
    # bf16 halves the dominant HBM stream that the kernel reads.
    def_T = jnp.pad(def_pos.astype(jnp.bfloat16).reshape(batch, CD),
                    ((0, pad), (0, 0))).T                           # (CD, batch_p) bf16

    cT = C.astype(jnp.float32).reshape(CD, K).T.astype(jnp.bfloat16)       # (K, CD)
    a_tab = jnp.concatenate([A.astype(jnp.float32).T,
                             bias.astype(jnp.float32).reshape(1, a_dims)],
                            axis=0).astype(jnp.bfloat16)                   # (K+1, a_dims)
    bT = B.astype(jnp.float32).reshape(NB, K).T.astype(jnp.bfloat16)       # (K, NB)

    # Hoisted (resident) row-iota tables for the one-hot compares.
    iota_a = jax.lax.broadcasted_iota(jnp.int32, (a_dims, tile), 0)
    iota_b = jax.lax.broadcasted_iota(jnp.int32, (NB, tile), 0)

    flops = 2 * batch_p * K * (CD + NB + a_dims + 1) + 4 * batch_p * K
    bytes_accessed = (batch_p * (2 * CD + 4 + 4 + 4)            # def(bf16)+idx+out
                      + 2 * (K * (CD + NB) + (K + 1) * a_dims)  # bf16 tables
                      + 4 * tile * (a_dims + NB))               # iota tables

    out = pl.pallas_call(
        low_kernel,
        out_shape=jax.ShapeDtypeStruct((1, batch_p), jnp.float32),
        grid=grid,
        in_specs=[
            pl.BlockSpec((1, tile), lambda i: (0, i)),        # a_idx   (batch-tiled)
            pl.BlockSpec((1, tile), lambda i: (0, i)),        # bh_idx  (batch-tiled)
            pl.BlockSpec((CD, tile), lambda i: (0, i)),       # def_T   (batch-tiled, bf16)
            pl.BlockSpec((a_dims, tile), lambda i: (0, 0)),   # iota_a  (resident)
            pl.BlockSpec((NB, tile), lambda i: (0, 0)),       # iota_b  (resident)
            pl.BlockSpec((K, CD), lambda i: (0, 0)),          # C       (resident)
            pl.BlockSpec((K + 1, a_dims), lambda i: (0, 0)),  # [A.T;b] (resident)
            pl.BlockSpec((K, NB), lambda i: (0, 0)),          # B       (resident)
        ],
        out_specs=pl.BlockSpec((1, tile), lambda i: (0, i)),
        compiler_params=pltpu.CompilerParams(
            dimension_semantics=("parallel",),
            # Headroom-safe on v7x (64 MiB physical), above the 32 MiB default
            # so very large tiles still fit on v5e/v6e (128 MiB physical).
            vmem_limit_bytes=48 * 1024 * 1024),
        cost_estimate=pl.CostEstimate(
            flops=flops, transcendentals=0, bytes_accessed=bytes_accessed),
    )(a_idx, bh_idx, def_T, iota_a, iota_b, cT, a_tab, bT)

    return out[0, :batch]                                           # (batch,)


def reference_forward(params, a, bh_pos, def_pos):
    """Exact (f32) forward pass of the PyTorch module."""
    A, B, C, b = params["A"], params["B"], params["C"], params["b"]
    ai = a.astype(jnp.int32)
    e = jnp.einsum("bcd,cde->be", def_pos.astype(jnp.float32), C.astype(jnp.float32))
    out = (A[ai]
           * B[bh_pos[:, 0].astype(jnp.int32), bh_pos[:, 1].astype(jnp.int32)]
           * e).sum(1)
    return out + b[ai]


def _round_bf16(x):
    return x.astype(jnp.bfloat16).astype(jnp.float32)


if __name__ == "__main__":
    # Module hyperparameters (small, consistent with the torch __init__).
    a_dims = 4
    b_dims = (5, 5)
    c_dims = (6, 6)
    K = 32
    batch = 8

    key = jax.random.PRNGKey(0)
    kA, kB, kC, ka, kbh, kdef = jax.random.split(key, 6)

    params = {
        "A": jax.random.normal(kA, (a_dims, K), dtype=jnp.float32),
        "B": jax.random.normal(kB, (*b_dims, K), dtype=jnp.float32),
        "C": jax.random.normal(kC, (*c_dims, K), dtype=jnp.float32),
        "b": jnp.zeros((a_dims,), dtype=jnp.float32),
    }

    a = jax.random.randint(ka, (batch,), 0, a_dims, dtype=jnp.int32)
    bh_pos = jnp.stack(
        [jax.random.randint(kbh, (batch,), 0, b_dims[0], dtype=jnp.int32),
         jax.random.randint(jax.random.fold_in(kbh, 1), (batch,), 0,
                            b_dims[1], dtype=jnp.int32)],
        axis=1)                                                    # (batch, 2)
    def_pos = jax.random.uniform(kdef, (batch, *c_dims), dtype=jnp.float32)

    out = jax.block_until_ready(low_forward(params, a, bh_pos, def_pos))
    assert out.shape == (batch,)

    # Tight check: reference computed with the same bf16-rounded operands the
    # kernel feeds the MXU (accumulation is f32 in both) -> matches to roundoff.
    params_bf = {k: _round_bf16(v) for k, v in params.items()}
    ref_bf = jax.block_until_ready(
        reference_forward(params_bf, a, bh_pos, _round_bf16(def_pos)))
    assert jnp.allclose(out, ref_bf, atol=2e-3, rtol=2e-3), (
        jnp.max(jnp.abs(out - ref_bf)))

    # Loose check against the exact f32 module semantics (bf16 MXU operands
    # cost a few tenths of a percent of relative error per factor).
    ref = jax.block_until_ready(reference_forward(params, a, bh_pos, def_pos))
    assert jnp.allclose(out, ref, atol=0.5, rtol=0.05), (
        jnp.max(jnp.abs(out - ref)))

    print("KERNEL_OK")
</pallas_src>

<mosaic_0001>
module attributes {stable_mosaic.version = 11 : i64} {
  func.func @low_kernel(%arg0: i32, %arg1: memref<1x128xi32, #tpu.memory_space<vmem>>, %arg2: memref<1x128xi32, #tpu.memory_space<vmem>>, %arg3: memref<36x128xbf16, #tpu.memory_space<vmem>>, %arg4: memref<4x128xi32, #tpu.memory_space<vmem>>, %arg5: memref<25x128xi32, #tpu.memory_space<vmem>>, %arg6: memref<32x36xbf16, #tpu.memory_space<vmem>>, %arg7: memref<33x4xbf16, #tpu.memory_space<vmem>>, %arg8: memref<32x25xbf16, #tpu.memory_space<vmem>>, %arg9: memref<1x128xf32, #tpu.memory_space<vmem>>) attributes {dimension_semantics = [#tpu.dimension_semantics<parallel>], iteration_bounds = array<i64: 1>, scalar_prefetch = 0 : i64, scratch_operands = 0 : i64, tpu.core_type = #tpu.core_type<tc>, window_params = [{transform_indices = @transform_0, window_bounds = array<i64: 1, 128>}, {transform_indices = @transform_1, window_bounds = array<i64: 1, 128>}, {transform_indices = @transform_2, window_bounds = array<i64: 36, 128>}, {pipeline_mode = #tpu.pipeline_mode<synchronous>, transform_indices = @transform_3, window_bounds = array<i64: 4, 128>}, {pipeline_mode = #tpu.pipeline_mode<synchronous>, transform_indices = @transform_4, window_bounds = array<i64: 25, 128>}, {pipeline_mode = #tpu.pipeline_mode<synchronous>, transform_indices = @transform_5, window_bounds = array<i64: 32, 36>}, {pipeline_mode = #tpu.pipeline_mode<synchronous>, transform_indices = @transform_6, window_bounds = array<i64: 33, 4>}, {pipeline_mode = #tpu.pipeline_mode<synchronous>, transform_indices = @transform_7, window_bounds = array<i64: 32, 25>}, {transform_indices = @transform_8, window_bounds = array<i64: 1, 128>}]} {
    %c0 = arith.constant 0 : index
    %c0_0 = arith.constant 0 : index
    %0 = vector.load %arg4[%c0, %c0_0] : memref<4x128xi32, #tpu.memory_space<vmem>>, vector<4x128xi32>
    %c0_1 = arith.constant 0 : index
    %c0_2 = arith.constant 0 : index
    %1 = vector.load %arg1[%c0_1, %c0_2] : memref<1x128xi32, #tpu.memory_space<vmem>>, vector<1x128xi32>
    %2 = vector.broadcast %1 : vector<1x128xi32> to vector<4x128xi32>
    %3 = arith.cmpi eq, %0, %2 : vector<4x128xi32>
    %4 = arith.extui %3 : vector<4x128xi1> to vector<4x128xi32>
    %5 = arith.sitofp %4 : vector<4x128xi32> to vector<4x128xf32>
    %6 = arith.truncf %5 : vector<4x128xf32> to vector<4x128xbf16>
    %c0_3 = arith.constant 0 : index
    %c0_4 = arith.constant 0 : index
    %7 = vector.load %arg5[%c0_3, %c0_4] : memref<25x128xi32, #tpu.memory_space<vmem>>, vector<25x128xi32>
    %c0_5 = arith.constant 0 : index
    %c0_6 = arith.constant 0 : index
    %8 = vector.load %arg2[%c0_5, %c0_6] : memref<1x128xi32, #tpu.memory_space<vmem>>, vector<1x128xi32>
    %9 = vector.broadcast %8 : vector<1x128xi32> to vector<25x128xi32>
    %10 = arith.cmpi eq, %7, %9 : vector<25x128xi32>
    %11 = arith.extui %10 : vector<25x128xi1> to vector<25x128xi32>
    %12 = arith.sitofp %11 : vector<25x128xi32> to vector<25x128xf32>
    %13 = arith.truncf %12 : vector<25x128xf32> to vector<25x128xbf16>
    %c0_7 = arith.constant 0 : index
    %c0_8 = arith.constant 0 : index
    %14 = vector.load %arg6[%c0_7, %c0_8] : memref<32x36xbf16, #tpu.memory_space<vmem>>, vector<32x36xbf16>
    %c0_9 = arith.constant 0 : index
    %c0_10 = arith.constant 0 : index
    %15 = vector.load %arg3[%c0_9, %c0_10] : memref<36x128xbf16, #tpu.memory_space<vmem>>, vector<36x128xbf16>
    %cst = arith.constant dense<0.000000e+00> : vector<32x128xf32>
    %16 = tpu.matmul %14, %15, %cst {dimension_numbers = #tpu.dot_dimension_numbers<[1], [0], [0], [1], [0, 0, 1, 1], [], []>} : vector<32x36xbf16>, vector<36x128xbf16>, vector<32x128xf32> -> vector<32x128xf32>
    %c0_11 = arith.constant 0 : index
    %c0_12 = arith.constant 0 : index
    %17 = vector.load %arg7[%c0_11, %c0_12] : memref<33x4xbf16, #tpu.memory_space<vmem>>, vector<33x4xbf16>
    %cst_13 = arith.constant dense<0.000000e+00> : vector<33x128xf32>
    %18 = tpu.matmul %17, %6, %cst_13 {dimension_numbers = #tpu.dot_dimension_numbers<[1], [0], [0], [1], [0, 0, 1, 1], [], []>} : vector<33x4xbf16>, vector<4x128xbf16>, vector<33x128xf32> -> vector<33x128xf32>
    %c0_14 = arith.constant 0 : index
    %c0_15 = arith.constant 0 : index
    %19 = vector.load %arg8[%c0_14, %c0_15] : memref<32x25xbf16, #tpu.memory_space<vmem>>, vector<32x25xbf16>
    %cst_16 = arith.constant dense<0.000000e+00> : vector<32x128xf32>
    %20 = tpu.matmul %19, %13, %cst_16 {dimension_numbers = #tpu.dot_dimension_numbers<[1], [0], [0], [1], [0, 0, 1, 1], [], []>} : vector<32x25xbf16>, vector<25x128xbf16>, vector<32x128xf32> -> vector<32x128xf32>
    %21 = vector.extract_strided_slice %18 {offsets = [0, 0], sizes = [32, 128], strides = [1, 1]} : vector<33x128xf32> to vector<32x128xf32>
    %22 = vector.extract_strided_slice %18 {offsets = [32, 0], sizes = [1, 128], strides = [1, 1]} : vector<33x128xf32> to vector<1x128xf32>
    %23 = arith.mulf %21, %20 : vector<32x128xf32>
    %24 = arith.mulf %23, %16 : vector<32x128xf32>
    %cst_17 = arith.constant dense<0.000000e+00> : vector<128xf32>
    %25 = vector.multi_reduction <add>, %24, %cst_17 [0] : vector<32x128xf32> to vector<128xf32>
    %26 = vector.shape_cast %25 : vector<128xf32> to vector<1x128xf32>
    %27 = arith.addf %26, %22 : vector<1x128xf32>
    %c0_18 = arith.constant 0 : index
    %c0_19 = arith.constant 0 : index
    %28 = vector.load %arg9[%c0_18, %c0_19] : memref<1x128xf32, #tpu.memory_space<vmem>>, vector<1x128xf32>
    tpu.vector_store %arg9[%c0_18, %c0_19], %27 {strides = array<i32>} : memref<1x128xf32, #tpu.memory_space<vmem>>, vector<1x128xf32>,
    return
  }
  func.func @transform_0(%arg0: i32) -> (i32, i32) {
    %c0_i32 = arith.constant 0 : i32
    %c0_i32_0 = arith.constant 0 : i32
    return %c0_i32, %arg0 : i32, i32
  }
  func.func @transform_1(%arg0: i32) -> (i32, i32) {
    %c0_i32 = arith.constant 0 : i32
    %c0_i32_0 = arith.constant 0 : i32
    return %c0_i32, %arg0 : i32, i32
  }
  func.func @transform_2(%arg0: i32) -> (i32, i32) {
    %c0_i32 = arith.constant 0 : i32
    %c0_i32_0 = arith.constant 0 : i32
    return %c0_i32, %arg0 : i32, i32
  }
  func.func @transform_3(%arg0: i32) -> (i32, i32) {
    %c0_i32 = arith.constant 0 : i32
    %c0_i32_0 = arith.constant 0 : i32
    %c0_i32_1 = arith.constant 0 : i32
    return %c0_i32, %c0_i32_0 : i32, i32
  }
  func.func @transform_4(%arg0: i32) -> (i32, i32) {
    %c0_i32 = arith.constant 0 : i32
    %c0_i32_0 = arith.constant 0 : i32
    %c0_i32_1 = arith.constant 0 : i32
    return %c0_i32, %c0_i32_0 : i32, i32
  }
  func.func @transform_5(%arg0: i32) -> (i32, i32) {
    %c0_i32 = arith.constant 0 : i32
    %c0_i32_0 = arith.constant 0 : i32
    %c0_i32_1 = arith.constant 0 : i32
    return %c0_i32, %c0_i32_0 : i32, i32
  }
  func.func @transform_6(%arg0: i32) -> (i32, i32) {
    %c0_i32 = arith.constant 0 : i32
    %c0_i32_0 = arith.constant 0 : i32
    %c0_i32_1 = arith.constant 0 : i32
    return %c0_i32, %c0_i32_0 : i32, i32
  }
  func.func @transform_7(%arg0: i32) -> (i32, i32) {
    %c0_i32 = arith.constant 0 : i32
    %c0_i32_0 = arith.constant 0 : i32
    %c0_i32_1 = arith.constant 0 : i32
    return %c0_i32, %c0_i32_0 : i32, i32
  }
  func.func @transform_8(%arg0: i32) -> (i32, i32) {
    %c0_i32 = arith.constant 0 : i32
    %c0_i32_0 = arith.constant 0 : i32
    return %c0_i32, %arg0 : i32, i32
  }
}

</mosaic_0001>

<llo_original>
// kernel: tpu_custom_call.1
$region0: #{tpu_custom_call.1}
  #allocation0 [shape = 'u32[]', space=smem, size = 0x4, offset = 0x4, fixed_abs, tag = 'smem constant byte address 0x4 - core index']
  #allocation1 [shape = 'u32[144,128]{1,0:T(1,128)}', space=vmem, size = 0x12000, scoped, tag = 'internal scratch']
  %s0 = inlined_call_operand.vmem [shape: s32[1,128], index: 0, kind: input, shape index: {}]
  %s1 = inlined_call_operand.hbm [shape: s32[1,128], index: 1, kind: input, shape index: {}]
  %s2 = inlined_call_operand.vmem [shape: bf16[36,128], index: 2, kind: input, shape index: {}]
  %s3 = inlined_call_operand.vmem [shape: s32[4,128], index: 3, kind: input, shape index: {}]
  %s4 = inlined_call_operand.hbm [shape: s32[25,128], index: 4, kind: input, shape index: {}]
  %s5 = inlined_call_operand.hbm [shape: bf16[32,36], index: 5, kind: input, shape index: {}]
  %s6 = inlined_call_operand.vmem [shape: bf16[33,4], index: 6, kind: input, shape index: {}]
  %s7 = inlined_call_operand.hbm [shape: bf16[32,25], index: 7, kind: input, shape index: {}]
  %s8 = inlined_call_operand.hbm [shape: f32[1,128], index: 8, kind: output, shape index: {}]
  %s9 = sld [smem:[#allocation0]]
  $region58: #{tpu_custom_call.1} parent=0
    _
  %s11 = ssub.s32 1, %s9
  %s12 = scalar_select 0, %s11, %s9
  $region1: #{tpu_custom_call.1} parent=0
    #allocation2 [shape = 'u8[512]{0}', space=vmem, size = 0x400, scoped, tag = 'input window, operand 1, single buffered']
    #allocation3 [shape = 's32[1]{0}', space=sflag, size = 0x4, scoped, tag = 'scoped memory for tpu_custom_call.1']
    #allocation4 [shape = 's32[1]{0}', space=sflag, size = 0x4, scoped, tag = 'scoped memory for tpu_custom_call.1']
    #allocation5 [shape = 'u8[16384]{0}', space=vmem, size = 0x4000, scoped, tag = 'input window, operand 4, single buffered']
    #allocation6 [shape = 's32[1]{0}', space=sflag, size = 0x4, scoped, tag = 'scoped memory for tpu_custom_call.1']
    #allocation7 [shape = 'u8[8192]{0}', space=vmem, size = 0x2000, scoped, tag = 'input window, operand 5, single buffered']
    #allocation8 [shape = 'u8[8192]{0}', space=vmem, size = 0x2000, scoped, tag = 'input window, operand 7, single buffered']
    #allocation9 [shape = 's32[1]{0}', space=sflag, size = 0x4, scoped, tag = 'scoped memory for tpu_custom_call.1']
    #allocation10 [shape = 'u8[512]{0}', space=vmem, size = 0x400, scoped, tag = 'output window, operand 0, single buffered']
    %13 = vsyncpa [#allocation3], 0
    %14 = vsyncpa [#allocation6], 0
    %15 = vsyncpa [#allocation9], 0
    %16 = vsyncpa [#allocation4], 0
    // Predicated region
    $region2: #{tpu_custom_call.1} parent=1 // pred_check
      _
    $region3: #{tpu_custom_call.1} parent=1 // pred_check_branch
      %18 = sbr.rel (0) target = $region5
    $region4: #{tpu_custom_call.1} parent=1 // pred_region
      _
    $region5: #{tpu_custom_call.1} parent=1 // pred_fallthru
      _
    // Predicated region
    $region6: #{tpu_custom_call.1} parent=1 // pred_check
      _
    $region7: #{tpu_custom_call.1} parent=1 // pred_check_branch
      %20 = sbr.rel (0) target = $region9
    $region8: #{tpu_custom_call.1} parent=1 // pred_region
      %s22 = ssub.s32 16, 16
      %23 = vsyncadd [#allocation3], %s22
      %s25 = sshll.u32 [#allocation2], 4
      %s26 = int_to_ptr.vmem [resolvable:$true] %s25
      %28 = dma.hbm_to_vmem [thread:$0]  %s1, 16, %s26, [#allocation3]
    $region9: #{tpu_custom_call.1} parent=1 // pred_fallthru
      _
    // Predicated region
    $region10: #{tpu_custom_call.1} parent=1 // pred_check
      _
    $region11: #{tpu_custom_call.1} parent=1 // pred_check_branch
      %30 = sbr.rel (0) target = $region13
    $region12: #{tpu_custom_call.1} parent=1 // pred_region
      _
    $region13: #{tpu_custom_call.1} parent=1 // pred_fallthru
      _
    // Predicated region
    $region14: #{tpu_custom_call.1} parent=1 // pred_check
      _
    $region15: #{tpu_custom_call.1} parent=1 // pred_check_branch
      %32 = sbr.rel (0) target = $region17
    $region16: #{tpu_custom_call.1} parent=1 // pred_region
      _
    $region17: #{tpu_custom_call.1} parent=1 // pred_fallthru
      _
    // Predicated region
    $region18: #{tpu_custom_call.1} parent=1 // pred_check
      _
    $region19: #{tpu_custom_call.1} parent=1 // pred_check_branch
      %34 = sbr.rel (0) target = $region21
    $region20: #{tpu_custom_call.1} parent=1 // pred_region
      %s36 = ssub.s32 512, 512
      %37 = vsyncadd [#allocation6], %s36
      %s38 = sshll.u32 [#allocation5], 4
      %s39 = int_to_ptr.vmem [resolvable:$true] %s38
      %44 = dma.hbm_to_vmem [thread:$0]  %s4, 512, %s39, [#allocation6], 128, 128, 8
    $region21: #{tpu_custom_call.1} parent=1 // pred_fallthru
      _
    // Predicated region
    $region22: #{tpu_custom_call.1} parent=1 // pred_check
      _
    $region23: #{tpu_custom_call.1} parent=1 // pred_check_branch
      %46 = sbr.rel (0) target = $region25
    $region24: #{tpu_custom_call.1} parent=1 // pred_region
      %s48 = ssub.s32 256, 256
      %49 = vsyncadd [#allocation6], %s48
      %s50 = sshll.u32 [#allocation7], 4
      %s51 = int_to_ptr.vmem [resolvable:$true] %s50
      %56 = dma.hbm_to_vmem [thread:$0]  %s5, 256, %s51, [#allocation6], 64, 64, 4
    $region25: #{tpu_custom_call.1} parent=1 // pred_fallthru
      _
    // Predicated region
    $region26: #{tpu_custom_call.1} parent=1 // pred_check
      _
    $region27: #{tpu_custom_call.1} parent=1 // pred_check_branch
      %58 = sbr.rel (0) target = $region29
    $region28: #{tpu_custom_call.1} parent=1 // pred_region
      _
    $region29: #{tpu_custom_call.1} parent=1 // pred_fallthru
      _
    // Predicated region
    $region30: #{tpu_custom_call.1} parent=1 // pred_check
      _
    $region31: #{tpu_custom_call.1} parent=1 // pred_check_branch
      %60 = sbr.rel (0) target = $region33
    $region32: #{tpu_custom_call.1} parent=1 // pred_region
      %s62 = ssub.s32 256, 256
      %63 = vsyncadd [#allocation9], %s62
      %s64 = sshll.u32 [#allocation8], 4
      %s65 = int_to_ptr.vmem [resolvable:$true] %s64
      %70 = dma.hbm_to_vmem [thread:$0]  %s7, 256, %s65, [#allocation9], 64, 64, 4
    $region33: #{tpu_custom_call.1} parent=1 // pred_fallthru
      _
    // Predicated region
    $region34: #{tpu_custom_call.1} parent=1 // pred_check
      _
    $region35: #{tpu_custom_call.1} parent=1 // pred_check_branch
      %72 = sbr.rel (0) target = $region37
    $region36: #{tpu_custom_call.1} parent=1 // pred_region
      %73 = dma.done [#allocation3], 16
    $region37: #{tpu_custom_call.1} parent=1 // pred_fallthru
      _
    // Predicated region
    $region38: #{tpu_custom_call.1} parent=1 // pred_check
      _
    $region39: #{tpu_custom_call.1} parent=1 // pred_check_branch
      %75 = sbr.rel (0) target = $region41
    $region40: #{tpu_custom_call.1} parent=1 // pred_region
      %76 = dma.done [#allocation6], 512
    $region41: #{tpu_custom_call.1} parent=1 // pred_fallthru
      _
    // Predicated region
    $region42: #{tpu_custom_call.1} parent=1 // pred_check
      _
    $region43: #{tpu_custom_call.1} parent=1 // pred_check_branch
      %78 = sbr.rel (0) target = $region45
    $region44: #{tpu_custom_call.1} parent=1 // pred_region
      %79 = dma.done [#allocation6], 256
    $region45: #{tpu_custom_call.1} parent=1 // pred_fallthru
      _
    // Predicated region
    $region46: #{tpu_custom_call.1} parent=1 // pred_check
      _
    $region47: #{tpu_custom_call.1} parent=1 // pred_check_branch
      %81 = sbr.rel (0) target = $region49
    $region48: #{tpu_custom_call.1} parent=1 // pred_region
      %82 = dma.done [#allocation9], 256
    $region49: #{tpu_custom_call.1} parent=1 // pred_fallthru
      _
    %v84 = vld [vmem:[%s3] sm:$0xf]
    %v85 = vld [vmem:[%s0] sm:$0x1]
    %v86 = vlaneseq
    %v87 = vshrl.u32 %v86, 7
    %v88 = vsub.s32 0, %v87
    %v89 = vrot.slane %v85, %v88
    %vm90 = vcmp.eq.s32.totalorder %v84, %v89
    %v91 = vsel %vm90, 1, 0
    %v92 = vcvt.s32.f32 %v91
    %v93 = vpack.c.bf16 %v92, %v92
    %v94 = vld [vmem:[#allocation5] sm:$0xff]
    %v95 = vld [vmem:[#allocation5 + $0x8] sm:$0xff]
    %v96 = vld [vmem:[#allocation5 + $0x10] sm:$0xff]
    %v97 = vld [vmem:[#allocation5 + $0x18] sm:$0x1]
    %v98 = vld [vmem:[#allocation2] sm:$0x1]
    %v99 = vlaneseq
    %v100 = vshrl.u32 %v99, 7
    %v101 = vsub.s32 0, %v100
    %v102 = vrot.slane %v98, %v101
    %vm103 = vcmp.eq.s32.totalorder %v94, %v102
    %vm104 = vcmp.eq.s32.totalorder %v95, %v102
    %vm105 = vcmp.eq.s32.totalorder %v96, %v102
    %vm106 = vcmp.eq.s32.totalorder %v97, %v102
    %v107 = vsel %vm103, 1, 0
    %v108 = vsel %vm104, 1, 0
    %v109 = vsel %vm105, 1, 0
    %v110 = vsel %vm106, 1, 0
    %v111 = vcvt.s32.f32 %v107
    %v112 = vcvt.s32.f32 %v108
    %v113 = vcvt.s32.f32 %v109
    %v114 = vcvt.s32.f32 %v110
    %v115 = vpack.c.bf16 %v112, %v111
    %v116 = vpack.c.bf16 %v114, %v113
    %v117 = vld [vmem:[#allocation7] sm:$0xf]
    %v118 = vld [vmem:[#allocation7 + $0x4] sm:$0xf]
    %v119 = vld [vmem:[#allocation7 + $0x8] sm:$0xf]
    %v120 = vld [vmem:[#allocation7 + $0xc] sm:$0xf]
    %v121 = vld [vmem:[%s2] sm:$0xf]
    %v122 = vld [vmem:[%s2 + $0x4] sm:$0xf]
    %v123 = vld [vmem:[%s2 + $0x8] sm:$0xf]
    %v124 = vld [vmem:[%s2 + $0xc] sm:$0xf]
    %v125 = vld [vmem:[%s2 + $0x10] sm:$0x3]
    %v130 = vunpack.c.l.b16 %v117
    %v131 = vunpack.c.l.b16 %v118
    %v132 = vunpack.c.l.b16 %v119
    %v133 = vunpack.c.l.b16 %v120
    %v134 = vpack.c.b16 %v131, %v130
    %v135 = vpack.c.b16 %v133, %v132
    %v141 = vunpack.c.l.b16 %v121
    %v142 = vunpack.c.l.b16 %v122
    %v143 = vunpack.c.l.b16 %v123
    %v144 = vunpack.c.l.b16 %v124
    %v145 = vunpack.c.l.b16 %v125
    %v146 = vpack.c.b16 %v142, %v141
    %v147 = vpack.c.b16 %v144, %v143
    %v148 = vpack.c.b16 %v145, %v145
    %vm151 = vcmask 293888
    %v153 = vsel %vm151, %v134, 0
    %v156 = vsel %vm151, %v135, 0
    %vm158 = vcmask 1041408
    %v160 = vsel %vm158, %v148, 0
    %162 = vmatprep.subr.bf16.mxu0 0
    %163 = vmatpush1.bf16.msra.mxu0 0
    %164 = vmatprep.subr.bf16.mxu0 0
    %165 = vmatpush1.bf16.msra.mxu0 0
    %166 = vmatprep.subr.bf16.mxu0 0
    %167 = vmatpush1.bf16.msra.mxu0 0
    %168 = vmatprep.subr.bf16.mxu0 0
    %169 = vmatpush1.bf16.msra.mxu0 0
    %170 = vmatprep.subr.bf16.mxu0 0
    %171 = vmatpush1.bf16.msra.mxu0 0
    %172 = vmatprep.subr.bf16.mxu0 0
    %173 = vmatpush1.bf16.msra.mxu0 %v160
    %174 = vmatprep.subr.bf16.mxu0 0
    %175 = vmatpush1.bf16.msra.mxu0 %v147
    %176 = vmatprep.subr.bf16.mxu0 0
    %177 = vmatpush1.bf16.msra.mxu0 %v146
    %178 = vmatprep.subr.bf16.mxu0 0
    %179 = vmatpush2.bf16.msra.mxu0 0
    %180 = vmatprep.subr.bf16.mxu0 0
    %181 = vmatpush2.bf16.msra.mxu0 0
    %182 = vmatprep.subr.bf16.mxu0 0
    %183 = vmatpush2.bf16.msra.mxu0 0
    %184 = vmatprep.subr.bf16.mxu0 0
    %185 = vmatpush2.bf16.msra.mxu0 0
    %186 = vmatprep.subr.bf16.mxu0 0
    %187 = vmatpush2.bf16.msra.mxu0 0
    %188 = vmatprep.subr.bf16.mxu0 0
    %189 = vmatpush2.bf16.msra.mxu0 0
    %190 = vmatprep.subr.bf16.mxu0 0
    %191 = vmatpush2.bf16.msra.mxu0 0
    %192 = vmatprep.subr.bf16.mxu0 0
    %193 = vmatpush2.bf16.msra.mxu0 0
    %194 = vmatprep.mubr.bf16.mxu0 0
    %195 = vmatmul.mubr.bf16.gmra.mxu0 %v153
    %v196 = vpop.f32.mrf.mxu0
    %v197 = vadd.f32 0.0, %v196
    %v198 = vpop.f32.mrf.mxu0
    %v199 = vpop.f32.mrf.mxu0
    %v200 = vadd.f32 0.0, %v199
    %v201 = vpop.f32.mrf.mxu0
    %202 = vmatprep.mubr.bf16.mxu0 0
    %203 = vmatmul.mubr.bf16.gmra.mxu0 %v156
    %v204 = vpop.f32.mrf.mxu0
    %v205 = vadd.f32 0.0, %v204
    %v206 = vpop.f32.mrf.mxu0
    %v207 = vpop.f32.mrf.mxu0
    %v208 = vadd.f32 0.0, %v207
    %v209 = vpop.f32.mrf.mxu0
    %210 = vdwg.mxu0
    %v211 = vld [vmem:[%s6] sm:$0xf]
    %v212 = vld [vmem:[%s6 + $0x4] sm:$0xf]
    %v213 = vld [vmem:[%s6 + $0x8] sm:$0xf]
    %v214 = vld [vmem:[%s6 + $0xc] sm:$0xf]
    %v215 = vld [vmem:[%s6 + $0x10] sm:$0x1]
    %v221 = vunpack.c.l.b16 %v211
    %v222 = vunpack.c.l.b16 %v212
    %v223 = vunpack.c.l.b16 %v213
    %v224 = vunpack.c.l.b16 %v214
    %v225 = vunpack.c.l.b16 %v215
    %v226 = vpack.c.b16 %v222, %v221
    %v227 = vpack.c.b16 %v224, %v223
    %v228 = vpack.c.b16 %v225, %v225
    %vm229 = vcmask 31744
    %v231 = vsel %vm229, %v226, 0
    %v234 = vsel %vm229, %v227, 0
    %v237 = vsel %vm229, %v228, 0
    %v240 = vsel %vm158, %v93, 0
    %242 = vmatprep.subr.bf16.mxu0 0
    %243 = vmatpush1.bf16.msra.mxu0 0
    %244 = vmatprep.subr.bf16.mxu0 0
    %245 = vmatpush1.bf16.msra.mxu0 0
    %246 = vmatprep.subr.bf16.mxu0 0
    %247 = vmatpush1.bf16.msra.mxu0 0
    %248 = vmatprep.subr.bf16.mxu0 0
    %249 = vmatpush1.bf16.msra.mxu0 0
    %250 = vmatprep.subr.bf16.mxu0 0
    %251 = vmatpush1.bf16.msra.mxu0 0
    %252 = vmatprep.subr.bf16.mxu0 0
    %253 = vmatpush1.bf16.msra.mxu0 0
    %254 = vmatprep.subr.bf16.mxu0 0
    %255 = vmatpush1.bf16.msra.mxu0 0
    %256 = vmatprep.subr.bf16.mxu0 0
    %257 = vmatpush1.bf16.msra.mxu0 %v240
    %258 = vmatprep.subr.bf16.mxu0 0
    %259 = vmatpush2.bf16.msra.mxu0 0
    %260 = vmatprep.subr.bf16.mxu0 0
    %261 = vmatpush2.bf16.msra.mxu0 0
    %262 = vmatprep.subr.bf16.mxu0 0
    %263 = vmatpush2.bf16.msra.mxu0 0
    %264 = vmatprep.subr.bf16.mxu0 0
    %265 = vmatpush2.bf16.msra.mxu0 0
    %266 = vmatprep.subr.bf16.mxu0 0
    %267 = vmatpush2.bf16.msra.mxu0 0
    %268 = vmatprep.subr.bf16.mxu0 0
    %269 = vmatpush2.bf16.msra.mxu0 0
    %270 = vmatprep.subr.bf16.mxu0 0
    %271 = vmatpush2.bf16.msra.mxu0 0
    %272 = vmatprep.subr.bf16.mxu0 0
    %273 = vmatpush2.bf16.msra.mxu0 0
    %274 = vmatprep.mubr.bf16.mxu0 0
    %275 = vmatmul.mubr.bf16.gmra.mxu0 %v231
    %v276 = vpop.f32.mrf.mxu0
    %v277 = vadd.f32 0.0, %v276
    %v278 = vpop.f32.mrf.mxu0
    %v279 = vpop.f32.mrf.mxu0
    %v280 = vadd.f32 0.0, %v279
    %v281 = vpop.f32.mrf.mxu0
    %282 = vmatprep.mubr.bf16.mxu0 0
    %283 = vmatmul.mubr.bf16.gmra.mxu0 %v234
    %v284 = vpop.f32.mrf.mxu0
    %v285 = vadd.f32 0.0, %v284
    %v286 = vpop.f32.mrf.mxu0
    %v287 = vpop.f32.mrf.mxu0
    %v288 = vadd.f32 0.0, %v287
    %v289 = vpop.f32.mrf.mxu0
    %290 = vmatprep.mubr.bf16.mxu0 0
    %291 = vmatmul.mubr.bf16.gmra.mxu0 %v237
    %v292 = vpop.f32.mrf.mxu0
    %v293 = vadd.f32 0.0, %v292
    %v294 = vpop.f32.mrf.mxu0
    %v295 = vpop.f32.mrf.mxu0
    %v296 = vpop.f32.mrf.mxu0
    %297 = vdwg.mxu0
    %v298 = vld [vmem:[#allocation8] sm:$0xf]
    %v299 = vld [vmem:[#allocation8 + $0x4] sm:$0xf]
    %v300 = vld [vmem:[#allocation8 + $0x8] sm:$0xf]
    %v301 = vld [vmem:[#allocation8 + $0xc] sm:$0xf]
    %v306 = vunpack.c.l.b16 %v298
    %v307 = vunpack.c.l.b16 %v299
    %v308 = vunpack.c.l.b16 %v300
    %v309 = vunpack.c.l.b16 %v301
    %v310 = vpack.c.b16 %v307, %v306
    %v311 = vpack.c.b16 %v309, %v308
    %vm312 = vcmask 203776
    %v314 = vsel %vm312, %v310, 0
    %v317 = vsel %vm312, %v311, 0
    %vm319 = vcmask 1043456
    %vm320 = vcmask 1044480
    %v321 = vsel %vm319, 4294967295, 65535
    %v322 = vsel %vm320, %v321, 0
    %v324 = vand.u32 %v116, %v322
    %326 = vmatprep.subr.bf16.mxu0 0
    %327 = vmatpush1.bf16.msra.mxu0 0
    %328 = vmatprep.subr.bf16.mxu0 0
    %329 = vmatpush1.bf16.msra.mxu0 0
    %330 = vmatprep.subr.bf16.mxu0 0
    %331 = vmatpush1.bf16.msra.mxu0 0
    %332 = vmatprep.subr.bf16.mxu0 0
    %333 = vmatpush1.bf16.msra.mxu0 0
    %334 = vmatprep.subr.bf16.mxu0 0
    %335 = vmatpush1.bf16.msra.mxu0 0
    %336 = vmatprep.subr.bf16.mxu0 0
    %337 = vmatpush1.bf16.msra.mxu0 0
    %338 = vmatprep.subr.bf16.mxu0 0
    %339 = vmatpush1.bf16.msra.mxu0 %v324
    %340 = vmatprep.subr.bf16.mxu0 0
    %341 = vmatpush1.bf16.msra.mxu0 %v115
    %342 = vmatprep.subr.bf16.mxu0 0
    %343 = vmatpush2.bf16.msra.mxu0 0
    %344 = vmatprep.subr.bf16.mxu0 0
    %345 = vmatpush2.bf16.msra.mxu0 0
    %346 = vmatprep.subr.bf16.mxu0 0
    %347 = vmatpush2.bf16.msra.mxu0 0
    %348 = vmatprep.subr.bf16.mxu0 0
    %349 = vmatpush2.bf16.msra.mxu0 0
    %350 = vmatprep.subr.bf16.mxu0 0
    %351 = vmatpush2.bf16.msra.mxu0 0
    %352 = vmatprep.subr.bf16.mxu0 0
    %353 = vmatpush2.bf16.msra.mxu0 0
    %354 = vmatprep.subr.bf16.mxu0 0
    %355 = vmatpush2.bf16.msra.mxu0 0
    %356 = vmatprep.subr.bf16.mxu0 0
    %357 = vmatpush2.bf16.msra.mxu0 0
    %358 = vmatprep.mubr.bf16.mxu0 0
    %359 = vmatmul.mubr.bf16.gmra.mxu0 %v314
    %v360 = vpop.f32.mrf.mxu0
    %v361 = vadd.f32 0.0, %v360
    %v362 = vpop.f32.mrf.mxu0
    %v363 = vpop.f32.mrf.mxu0
    %v364 = vadd.f32 0.0, %v363
    %v365 = vpop.f32.mrf.mxu0
    %366 = vmatprep.mubr.bf16.mxu0 0
    %367 = vmatmul.mubr.bf16.gmra.mxu0 %v317
    %v368 = vpop.f32.mrf.mxu0
    %v369 = vadd.f32 0.0, %v368
    %v370 = vpop.f32.mrf.mxu0
    %v371 = vpop.f32.mrf.mxu0
    %v372 = vadd.f32 0.0, %v371
    %v373 = vpop.f32.mrf.mxu0
    %374 = vdwg.mxu0
    %v375 = vmul.f32 %v277, %v361
    %v376 = vmul.f32 %v280, %v364
    %v377 = vmul.f32 %v285, %v369
    %v378 = vmul.f32 %v288, %v372
    %v379 = vmul.f32 %v375, %v197
    %v380 = vmul.f32 %v376, %v200
    %v381 = vmul.f32 %v377, %v205
    %v382 = vmul.f32 %v378, %v208
    %v383 = vadd.f32 %v379, %v380
    %v384 = vadd.f32 %v383, %v381
    %v385 = vadd.f32 %v384, %v382
    %v386 = vrot.slane %v385, 4
    %v387 = vadd.f32 %v385, %v386
    %v388 = vrot.slane %v387, 2
    %v389 = vadd.f32 %v387, %v388
    %v390 = vrot.slane %v389, 1
    %v391 = vadd.f32 %v389, %v390
    %v392 = vadd.f32 %v391, %v293
    %393 = vst [vmem:[#allocation10] sm:$0x1] %v392
    // Predicated region
    $region50: #{tpu_custom_call.1} parent=1 // pred_check
      _
    $region51: #{tpu_custom_call.1} parent=1 // pred_check_branch
      %395 = sbr.rel (0) target = $region53
    $region52: #{tpu_custom_call.1} parent=1 // pred_region
      %s397 = ssub.s32 16, 16
      %398 = vsyncadd [#allocation4], %s397
      %s400 = sshll.u32 [#allocation10], 4
      %s401 = int_to_ptr.vmem [resolvable:$true] %s400
      %403 = dma.vmem_to_hbm [thread:$0]  %s401, 16, %s8, [#allocation4]
    $region53: #{tpu_custom_call.1} parent=1 // pred_fallthru
      _
    // Predicated region
    $region54: #{tpu_custom_call.1} parent=1 // pred_check
      _
    $region55: #{tpu_custom_call.1} parent=1 // pred_check_branch
      %405 = sbr.rel (0) target = $region57
    $region56: #{tpu_custom_call.1} parent=1 // pred_region
      %406 = dma.done [#allocation4], 16
    $region57: #{tpu_custom_call.1} parent=1 // pred_fallthru
      _
    %407 = vsyncpa [#allocation3], 1
    %408 = vsyncpa [#allocation6], 1
    %409 = vsyncpa [#allocation9], 1
    %410 = vsyncpa [#allocation4], 1

</llo_original>
